<compile_context>
chip_gen: v6e
topology: v6e:2x2x1
jax: 0.10.0
libtpu: 0.0.40
codegen_flags: <defaults>
</compile_context>

<pallas_src>
import functools

import jax
import jax.numpy as jnp
from jax.experimental import pallas as pl
from jax.experimental.pallas import tpu as pltpu


def _round_up(x: int, m: int) -> int:
    return ((x + m - 1) // m) * m


def _cdiv(a: int, b: int) -> int:
    return (a + b - 1) // b


# Sublane packing per element size (bytes) -> rows packed per sublane group.
_SUBLANE = {1: 32, 2: 16, 4: 8}


def _vmem_capacity_bytes() -> int:
    """Per-core VMEM capacity; conservative fallback (v7x) if unavailable."""
    try:
        info = pltpu.get_tpu_info()
        cap = getattr(info, "vmem_capacity_bytes", None)
        if cap:
            return int(cap)
    except Exception:
        pass
    return 64 * 1024 * 1024


def _choose_tn(nf: int, pref: int) -> int:
    """Largest N tile <= pref, multiple of 256 (keeps the 256-wide MXU on
    v6e/v7x fed).  Prefer a tile that divides nf exactly (no wasted masked
    edge block) as long as it doesn't drop below pref/2 (which would hurt
    arithmetic intensity more than the edge waste)."""
    align = 256
    cap = min(pref, _round_up(nf, align))
    cap = max(align, cap - cap % align)
    if nf % align == 0:
        t = cap
        while t >= max(align, cap // 2):
            if nf % t == 0:
                return t
            t -= align
    return cap


def _choose_tk(nx: int, pref: int):
    """K tile + padded K extent.  Prefer a tile that divides nx exactly so no
    K padding (no extra HBM pass over x / weight in the wrapper) is needed;
    otherwise zero-pad K up to a lane-aligned tile (exact for a matmul)."""
    align = 256 if nx % 256 == 0 else 128
    cap = min(pref, _round_up(nx, align))
    cap = max(align, cap - cap % align)
    if nx % align == 0:
        t = cap
        while t >= align:
            if nx % t == 0:
                return t, nx          # exact: no K padding
            t -= align
    return cap, _round_up(nx, cap)    # padded K


def _vmem_bytes(tm, tn, tk, xb, wb, bb, ob, with_bias):
    """Double-buffered x / w / out tiles + f32 accumulator (+ bias tile)."""
    n = (2 * tm * tk * xb
         + 2 * tk * tn * wb
         + 2 * tm * tn * ob
         + tm * tn * 4)
    if with_bias:
        n += 2 * 8 * tn * bb          # (1, tn) tile padded to 8 sublanes
    return n


def _matmul_bias_kernel(x_ref, w_ref, b_ref, o_ref, acc_ref):
    k = pl.program_id(2)

    @pl.when(k == 0)
    def _():
        # Fold bias into the accumulator init (saves an epilogue VPU add).
        acc_ref[...] = jnp.broadcast_to(
            b_ref[...].astype(jnp.float32), acc_ref.shape)

    acc_ref[...] += jnp.dot(
        x_ref[...], w_ref[...], preferred_element_type=jnp.float32)

    @pl.when(k == pl.num_programs(2) - 1)
    def _():
        o_ref[...] = acc_ref[...].astype(o_ref.dtype)


def _matmul_kernel(x_ref, w_ref, o_ref, acc_ref):
    k = pl.program_id(2)

    @pl.when(k == 0)
    def _():
        acc_ref[...] = jnp.zeros_like(acc_ref)

    acc_ref[...] += jnp.dot(
        x_ref[...], w_ref[...], preferred_element_type=jnp.float32)

    @pl.when(k == pl.num_programs(2) - 1)
    def _():
        o_ref[...] = acc_ref[...].astype(o_ref.dtype)


@functools.partial(
    jax.jit, static_argnames=("skip_bias_add", "tm", "tn", "tk"))
def conv1d_forward(x, weight, bias, *, skip_bias_add=False,
                   tm=1024, tn=2048, tk=512):
    """Pallas Conv1D forward.

    x: (..., nx), weight: (nx, nf), bias: (nf,)

    Notes: accumulation is always f32; on v5e the biggest lever is passing
    bf16 x / weight (MXU bf16 >> f32), at which point moderate tiles already
    hit the HBM roofline — tile sizing below adapts to the VMEM budget.
    """
    nx, nf = weight.shape
    size_out = x.shape[:-1] + (nf,)
    x2d = x.reshape(-1, nx)
    M = x2d.shape[0]
    out_dtype = x.dtype

    xb = jnp.dtype(x.dtype).itemsize
    wb = jnp.dtype(weight.dtype).itemsize
    bb = jnp.dtype(bias.dtype).itemsize
    ob = jnp.dtype(out_dtype).itemsize
    sub = _SUBLANE.get(xb, 8)

    # ---- tile selection -------------------------------------------------
    tm = min(tm, _round_up(M, sub))
    tm = max(sub, tm - tm % sub)           # dtype-aware sublane alignment
    tn = _choose_tn(nf, tn)
    tk, K_pad = _choose_tk(nx, tk)

    vmem_cap = _vmem_capacity_bytes()
    budget = int(vmem_cap * 0.8)           # leave compiler headroom
    while _vmem_bytes(tm, tn, tk, xb, wb, bb, ob, not skip_bias_add) > budget:
        if tn > 256:
            tn //= 2
        elif tm > sub:
            tm = max(sub, (tm // 2) - (tm // 2) % sub)
        elif tk > 128 and K_pad % (tk // 2) == 0:
            tk //= 2
        else:
            break

    # v7x has two TensorCores: for non-trivial problems guarantee >= 2
    # parallel (i, j) grid steps so the second core isn't idle.
    if (M * nf >= (1 << 17)) and _cdiv(M, tm) * _cdiv(nf, tn) < 2:
        if tn >= 512 and _cdiv(nf, tn // 2) >= 2:
            tn //= 2
        elif tm >= 2 * sub:
            half = max(sub, (tm // 2) - (tm // 2) % sub)
            if _cdiv(M, half) >= 2:
                tm = half

    grid = (_cdiv(M, tm), _cdiv(nf, tn), K_pad // tk)

    # ---- K padding only (exact for a matmul); M / N edges are masked -----
    if K_pad != nx:
        x2d = jnp.pad(x2d, ((0, 0), (0, K_pad - nx)))
        weight = jnp.pad(weight, ((0, K_pad - nx), (0, 0)))
    bias2d = bias.reshape(1, nf)

    x_spec = pl.BlockSpec((tm, tk), lambda i, j, k: (i, k))
    w_spec = pl.BlockSpec((tk, tn), lambda i, j, k: (k, j))
    b_spec = pl.BlockSpec((1, tn), lambda i, j, k: (0, j))
    o_spec = pl.BlockSpec((tm, tn), lambda i, j, k: (i, j))

    n_i, n_j = grid[0], grid[1]
    vmem_needed = _vmem_bytes(tm, tn, tk, xb, wb, bb, ob, not skip_bias_add)
    vmem_limit = int(min(budget, max(16 * 1024 * 1024, vmem_needed * 5 // 4)))

    cost = pl.CostEstimate(
        flops=2 * M * K_pad * nf,
        transcendentals=0,
        bytes_accessed=(
            M * K_pad * xb * n_j          # x re-read once per N tile
            + K_pad * nf * wb * n_i       # weight re-read once per M tile
            + nf * bb * n_i
            + M * nf * ob
        ),
    )

    compiler_params = pltpu.CompilerParams(
        dimension_semantics=("parallel", "parallel", "arbitrary"),
        vmem_limit_bytes=vmem_limit,
    )
    scratch_shapes = [pltpu.VMEM((tm, tn), jnp.float32)]

    if not skip_bias_add:
        out = pl.pallas_call(
            _matmul_bias_kernel,
            out_shape=jax.ShapeDtypeStruct((M, nf), out_dtype),
            grid_spec=pltpu.PrefetchScalarGridSpec(
                num_scalar_prefetch=0,
                grid=grid,
                in_specs=[x_spec, w_spec, b_spec],
                out_specs=o_spec,
                scratch_shapes=scratch_shapes,
            ),
            compiler_params=compiler_params,
            cost_estimate=cost,
        )(x2d, weight, bias2d)
        return out.reshape(size_out)
    else:
        out = pl.pallas_call(
            _matmul_kernel,
            out_shape=jax.ShapeDtypeStruct((M, nf), out_dtype),
            grid_spec=pltpu.PrefetchScalarGridSpec(
                num_scalar_prefetch=0,
                grid=grid,
                in_specs=[x_spec, w_spec],
                out_specs=o_spec,
                scratch_shapes=scratch_shapes,
            ),
            compiler_params=compiler_params,
            cost_estimate=cost,
        )(x2d, weight)
        return out.reshape(size_out), bias


if __name__ == "__main__":
    # Small GPT-style projection shapes.
    batch, seq, nx, nf = 2, 8, 32, 64

    key = jax.random.PRNGKey(0)
    kx, kw = jax.random.split(key)
    x = jax.random.normal(kx, (batch, seq, nx), dtype=jnp.float32)
    # nn.init.normal_(w, std=0.02), bias = zeros (deterministic in-script)
    weight = 0.02 * jax.random.normal(kw, (nx, nf), dtype=jnp.float32)
    bias = jnp.zeros((nf,), dtype=jnp.float32)

    # Path 1: fused bias add.
    y = jax.block_until_ready(conv1d_forward(x, weight, bias))

    # Path 2: skip_bias_add=True returns (matmul, bias).
    y_nb, b_out = conv1d_forward(x, weight, bias, skip_bias_add=True)
    y_nb = jax.block_until_ready(y_nb)

    ref = (x.reshape(-1, nx) @ weight + bias).reshape(batch, seq, nf)
    assert y.shape == (batch, seq, nf)
    assert jnp.allclose(y, ref, atol=1e-5, rtol=1e-5)
    assert jnp.allclose(y_nb + bias, ref, atol=1e-5, rtol=1e-5)
    assert b_out.shape == (nf,)

    # Non-tile-divisible, larger shape: exercises masked M/N edge blocks and
    # the K-padding path (M = 300, nx = 96, nf = 192).
    kx2, kw2 = jax.random.split(jax.random.PRNGKey(1))
    x2 = jax.random.normal(kx2, (3, 100, 96), dtype=jnp.float32)
    w2 = 0.02 * jax.random.normal(kw2, (96, 192), dtype=jnp.float32)
    b2 = 0.1 * jnp.arange(192, dtype=jnp.float32)
    y2 = jax.block_until_ready(conv1d_forward(x2, w2, b2))
    ref2 = (x2.reshape(-1, 96) @ w2 + b2).reshape(3, 100, 192)
    assert jnp.allclose(y2, ref2, atol=1e-4, rtol=1e-4)

    # bf16 path: exercises dtype-aware sublane rounding; accumulation is f32.
    y_bf = jax.block_until_ready(
        conv1d_forward(x.astype(jnp.bfloat16),
                       weight.astype(jnp.bfloat16),
                       bias.astype(jnp.bfloat16)))
    assert jnp.allclose(y_bf.astype(jnp.float32), ref, atol=2e-2, rtol=5e-2)

    print("KERNEL_OK")
</pallas_src>

<mosaic_0001>
module attributes {stable_mosaic.version = 11 : i64} {
  func.func @_matmul_bias_kernel(%arg0: i32, %arg1: i32, %arg2: i32, %arg3: memref<16x128xf32, #tpu.memory_space<vmem>>, %arg4: memref<128x256xf32, #tpu.memory_space<vmem>>, %arg5: memref<1x256xf32, #tpu.memory_space<vmem>>, %arg6: memref<16x256xf32, #tpu.memory_space<vmem>>, %arg7: memref<16x256xf32, #tpu.memory_space<vmem>>) attributes {dimension_semantics = [#tpu.dimension_semantics<parallel>, #tpu.dimension_semantics<parallel>, #tpu.dimension_semantics<arbitrary>], iteration_bounds = array<i64: 1, 1, 1>, scalar_prefetch = 0 : i64, scratch_operands = 1 : i64, tpu.core_type = #tpu.core_type<tc>, window_params = [{transform_indices = @transform_0, window_bounds = array<i64: 16, 128>}, {transform_indices = @transform_1, window_bounds = array<i64: 128, 256>}, {transform_indices = @transform_2, window_bounds = array<i64: 1, 256>}, {transform_indices = @transform_3, window_bounds = array<i64: 16, 256>}]} {
    %c0_i32 = arith.constant 0 : i32
    %0 = arith.cmpi eq, %arg2, %c0_i32 : i32
    %1 = arith.extui %0 : i1 to i32
    %c0_i32_0 = arith.constant 0 : i32
    %2 = arith.cmpi ne, %1, %c0_i32_0 : i32
    scf.if %2 {
      %c0_10 = arith.constant 0 : index
      %c0_11 = arith.constant 0 : index
      %12 = vector.load %arg5[%c0_10, %c0_11] : memref<1x256xf32, #tpu.memory_space<vmem>>, vector<1x256xf32>
      %13 = vector.shape_cast %12 : vector<1x256xf32> to vector<1x256xf32>
      %14 = vector.broadcast %13 : vector<1x256xf32> to vector<16x256xf32>
      %c0_12 = arith.constant 0 : index
      %c0_13 = arith.constant 0 : index
      %15 = vector.load %arg7[%c0_12, %c0_13] : memref<16x256xf32, #tpu.memory_space<vmem>>, vector<16x256xf32>
      tpu.vector_store %arg7[%c0_12, %c0_13], %14 {strides = array<i32>} : memref<16x256xf32, #tpu.memory_space<vmem>>, vector<16x256xf32>,
    } else {
    }
    %c0 = arith.constant 0 : index
    %c0_1 = arith.constant 0 : index
    %3 = vector.load %arg7[%c0, %c0_1] : memref<16x256xf32, #tpu.memory_space<vmem>>, vector<16x256xf32>
    %c0_2 = arith.constant 0 : index
    %c0_3 = arith.constant 0 : index
    %4 = vector.load %arg3[%c0_2, %c0_3] : memref<16x128xf32, #tpu.memory_space<vmem>>, vector<16x128xf32>
    %c0_4 = arith.constant 0 : index
    %c0_5 = arith.constant 0 : index
    %5 = vector.load %arg4[%c0_4, %c0_5] : memref<128x256xf32, #tpu.memory_space<vmem>>, vector<128x256xf32>
    %cst = arith.constant dense<0.000000e+00> : vector<16x256xf32>
    %6 = tpu.matmul %4, %5, %cst {dimension_numbers = #tpu.dot_dimension_numbers<[1], [0], [0], [1], [0, 0, 1, 1], [], []>} : vector<16x128xf32>, vector<128x256xf32>, vector<16x256xf32> -> vector<16x256xf32>
    %7 = arith.addf %3, %6 : vector<16x256xf32>
    %c0_6 = arith.constant 0 : index
    %c0_7 = arith.constant 0 : index
    %8 = vector.load %arg7[%c0_6, %c0_7] : memref<16x256xf32, #tpu.memory_space<vmem>>, vector<16x256xf32>
    tpu.vector_store %arg7[%c0_6, %c0_7], %7 {strides = array<i32>} : memref<16x256xf32, #tpu.memory_space<vmem>>, vector<16x256xf32>,
    %c0_i32_8 = arith.constant 0 : i32
    %9 = arith.cmpi eq, %arg2, %c0_i32_8 : i32
    %10 = arith.extui %9 : i1 to i32
    %c0_i32_9 = arith.constant 0 : i32
    %11 = arith.cmpi ne, %10, %c0_i32_9 : i32
    scf.if %11 {
      %c0_10 = arith.constant 0 : index
      %c0_11 = arith.constant 0 : index
      %12 = vector.load %arg7[%c0_10, %c0_11] : memref<16x256xf32, #tpu.memory_space<vmem>>, vector<16x256xf32>
      %c0_12 = arith.constant 0 : index
      %c0_13 = arith.constant 0 : index
      %13 = vector.load %arg6[%c0_12, %c0_13] : memref<16x256xf32, #tpu.memory_space<vmem>>, vector<16x256xf32>
      tpu.vector_store %arg6[%c0_12, %c0_13], %12 {strides = array<i32>} : memref<16x256xf32, #tpu.memory_space<vmem>>, vector<16x256xf32>,
    } else {
    }
    return
  }
  func.func @transform_0(%arg0: i32, %arg1: i32, %arg2: i32) -> (i32, i32) {
    %c0_i32 = arith.constant 0 : i32
    return %arg0, %arg2 : i32, i32
  }
  func.func @transform_1(%arg0: i32, %arg1: i32, %arg2: i32) -> (i32, i32) {
    %c0_i32 = arith.constant 0 : i32
    return %arg2, %arg1 : i32, i32
  }
  func.func @transform_2(%arg0: i32, %arg1: i32, %arg2: i32) -> (i32, i32) {
    %c0_i32 = arith.constant 0 : i32
    %c0_i32_0 = arith.constant 0 : i32
    return %c0_i32, %arg1 : i32, i32
  }
  func.func @transform_3(%arg0: i32, %arg1: i32, %arg2: i32) -> (i32, i32) {
    %c0_i32 = arith.constant 0 : i32
    return %arg0, %arg1 : i32, i32
  }
}

</mosaic_0001>

<llo_original>
// kernel: conv1d_forward.1
$region0: #{conv1d_forward.1}
  #allocation0 [shape = 'u32[]', space=smem, size = 0x4, offset = 0x4, fixed_abs, tag = 'smem constant byte address 0x4 - core index']
  #allocation1 [shape = 'u32[144,128]{1,0:T(1,128)}', space=vmem, size = 0x12000, scoped, tag = 'internal scratch']
  #allocation2 [shape = 'f32[16,256]{1,0:T(8,128)}', space=vmem, size = 0x4000, scoped, tag = 'scratch operand']
  %s0 = inlined_call_operand.vmem [shape: f32[16,128], index: 0, kind: input, shape index: {}]
  %s1 = inlined_call_operand.vmem [shape: f32[128,64], index: 1, kind: input, shape index: {}]
  %s2 = inlined_call_operand.vmem [shape: f32[1,64], index: 2, kind: input, shape index: {}]
  %s3 = inlined_call_operand.hbm [shape: f32[16,64], index: 3, kind: output, shape index: {}]
  %s4 = sld [smem:[#allocation0]]
  $region68: #{conv1d_forward.1} parent=0
    _
  %s6 = ssub.s32 1, %s4
  %s7 = scalar_select 0, %s6, %s4
  $region1: #{conv1d_forward.1} parent=0
    #allocation3 [shape = 'u8[131072]{0}', space=vmem, size = 0x20000, scoped, tag = 'input window, operand 1, single buffered']
    #allocation4 [shape = 'u8[16384]{0}', space=vmem, size = 0x4000, scoped, tag = 'output window, operand 0, single buffered']
    #allocation5 [shape = 's32[1]{0}', space=sflag, size = 0x4, scoped, tag = 'scoped memory for conv1d_forward.1']
    %8 = vsyncpa [#allocation5], 0
    // Predicated region
    $region2: #{conv1d_forward.1} parent=1 // pred_check
      _
    $region3: #{conv1d_forward.1} parent=1 // pred_check_branch
      %10 = sbr.rel (0) target = $region5
    $region4: #{conv1d_forward.1} parent=1 // pred_region
      _
    $region5: #{conv1d_forward.1} parent=1 // pred_fallthru
      _
    // Predicated region
    $region6: #{conv1d_forward.1} parent=1 // pred_check
      _
    $region7: #{conv1d_forward.1} parent=1 // pred_check_branch
      %12 = sbr.rel (0) target = $region9
    $region8: #{conv1d_forward.1} parent=1 // pred_region
      // Predicated region
      $region10: #{conv1d_forward.1} parent=8 // pred_check
        _
      $region11: #{conv1d_forward.1} parent=8 // pred_check_branch
        %14 = sbr.rel (0) target = $region13
      $region12: #{conv1d_forward.1} parent=8 // pred_region
        // Predicated region
        $region14: #{conv1d_forward.1} parent=12 // pred_check
          _
        $region15: #{conv1d_forward.1} parent=12 // pred_check_branch
          %16 = sbr.rel (0) target = $region17
        $region16: #{conv1d_forward.1} parent=12 // pred_region
          // Predicated region
          $region29: #{conv1d_forward.1} parent=16 // pred_check
            _
          $region30: #{conv1d_forward.1} parent=16 // pred_check_branch
            %62 = sbr.rel (0) target = $region32
          $region31: #{conv1d_forward.1} parent=16 // pred_region
            loop: start=0, step=1, limit=1
            $region33: #{conv1d_forward.1} parent=31 // loop_pre_header
              _
            $region34: #{conv1d_forward.1} parent=31 // loop_header
              %s64 = sphi 0, %s68
              %p65 = scmp.ge.s32.totalorder %s64, 1
              %s69 = sphi %s1, %s1
              %s70 = sphi [#allocation3], [#allocation3]
            $region35: #{conv1d_forward.1} parent=31 // loop_header_branch
              %67 = sbr.rel (%p65) target = $region39
            $region36: #{conv1d_forward.1} parent=31 // loop_body
              %v71 = vld [vmem:[%s69] sm:$0xff]
              %72 = vst [vmem:[%s70] sm:$0xff] %v71
              %v73 = vld [vmem:[%s69 + $0x8] sm:$0xff]
              %74 = vst [vmem:[%s70 + $0x10] sm:$0xff] %v73
              %v75 = vld [vmem:[%s69 + $0x10] sm:$0xff]
              %76 = vst [vmem:[%s70 + $0x20] sm:$0xff] %v75
              %v77 = vld [vmem:[%s69 + $0x18] sm:$0xff]
              %78 = vst [vmem:[%s70 + $0x30] sm:$0xff] %v77
              %v79 = vld [vmem:[%s69 + $0x20] sm:$0xff]
              %80 = vst [vmem:[%s70 + $0x40] sm:$0xff] %v79
              %v81 = vld [vmem:[%s69 + $0x28] sm:$0xff]
              %82 = vst [vmem:[%s70 + $0x50] sm:$0xff] %v81
              %v83 = vld [vmem:[%s69 + $0x30] sm:$0xff]
              %84 = vst [vmem:[%s70 + $0x60] sm:$0xff] %v83
              %v85 = vld [vmem:[%s69 + $0x38] sm:$0xff]
              %86 = vst [vmem:[%s70 + $0x70] sm:$0xff] %v85
              %v87 = vld [vmem:[%s69 + $0x40] sm:$0xff]
              %88 = vst [vmem:[%s70 + $0x80] sm:$0xff] %v87
              %v89 = vld [vmem:[%s69 + $0x48] sm:$0xff]
              %90 = vst [vmem:[%s70 + $0x90] sm:$0xff] %v89
              %v91 = vld [vmem:[%s69 + $0x50] sm:$0xff]
              %92 = vst [vmem:[%s70 + $0xa0] sm:$0xff] %v91
              %v93 = vld [vmem:[%s69 + $0x58] sm:$0xff]
              %94 = vst [vmem:[%s70 + $0xb0] sm:$0xff] %v93
              %v95 = vld [vmem:[%s69 + $0x60] sm:$0xff]
              %96 = vst [vmem:[%s70 + $0xc0] sm:$0xff] %v95
              %v97 = vld [vmem:[%s69 + $0x68] sm:$0xff]
              %98 = vst [vmem:[%s70 + $0xd0] sm:$0xff] %v97
              %v99 = vld [vmem:[%s69 + $0x70] sm:$0xff]
              %100 = vst [vmem:[%s70 + $0xe0] sm:$0xff] %v99
              %v101 = vld [vmem:[%s69 + $0x78] sm:$0xff]
              %102 = vst [vmem:[%s70 + $0xf0] sm:$0xff] %v101
            $region37: #{conv1d_forward.1} parent=31 // loop_footer
              %s68 = sadd.s32 1, %s64
            $region38: #{conv1d_forward.1} parent=31 // loop_footer_branch
              %63 = sbr.rel target = $region34
            $region39: #{conv1d_forward.1} parent=31 // loop_exit
              _
          $region32: #{conv1d_forward.1} parent=16 // pred_fallthru
            _
          // Predicated region
          $region40: #{conv1d_forward.1} parent=16 // pred_check
            _
          $region41: #{conv1d_forward.1} parent=16 // pred_check_branch
            %104 = sbr.rel target = $region43
          $region42: #{conv1d_forward.1} parent=16 // pred_region
            _
          $region43: #{conv1d_forward.1} parent=16 // pred_fallthru
            _
        $region17: #{conv1d_forward.1} parent=12 // pred_fallthru
          _
        // Predicated region
        $region18: #{conv1d_forward.1} parent=12 // pred_check
          _
        $region19: #{conv1d_forward.1} parent=12 // pred_check_branch
          %18 = sbr.rel target = $region21
        $region20: #{conv1d_forward.1} parent=12 // pred_region
          %s20 = ssub.s32 256, 1
          loop: start=0, step=1, limit=1
          $region22: #{conv1d_forward.1} parent=20 // loop_pre_header
            _
          $region23: #{conv1d_forward.1} parent=20 // loop_header
            %s22 = sphi 0, %s26
            %p23 = scmp.ge.s32.totalorder %s22, 1
            %s27 = sphi %s1, %s1
            %s28 = sphi [#allocation3], [#allocation3]
          $region24: #{conv1d_forward.1} parent=20 // loop_header_branch
            %25 = sbr.rel (%p23) target = $region28
          $region25: #{conv1d_forward.1} parent=20 // loop_body
            %v29 = vld [vmem:[%s27] sm:%s20]
            %30 = vst [vmem:[%s28] sm:%s20] %v29
            %v31 = vld [vmem:[%s27 + $0x8] sm:%s20]
            %32 = vst [vmem:[%s28 + $0x10] sm:%s20] %v31
            %v33 = vld [vmem:[%s27 + $0x10] sm:%s20]
            %34 = vst [vmem:[%s28 + $0x20] sm:%s20] %v33
            %v35 = vld [vmem:[%s27 + $0x18] sm:%s20]
            %36 = vst [vmem:[%s28 + $0x30] sm:%s20] %v35
            %v37 = vld [vmem:[%s27 + $0x20] sm:%s20]
            %38 = vst [vmem:[%s28 + $0x40] sm:%s20] %v37
            %v39 = vld [vmem:[%s27 + $0x28] sm:%s20]
            %40 = vst [vmem:[%s28 + $0x50] sm:%s20] %v39
            %v41 = vld [vmem:[%s27 + $0x30] sm:%s20]
            %42 = vst [vmem:[%s28 + $0x60] sm:%s20] %v41
            %v43 = vld [vmem:[%s27 + $0x38] sm:%s20]
            %44 = vst [vmem:[%s28 + $0x70] sm:%s20] %v43
            %v45 = vld [vmem:[%s27 + $0x40] sm:%s20]
            %46 = vst [vmem:[%s28 + $0x80] sm:%s20] %v45
            %v47 = vld [vmem:[%s27 + $0x48] sm:%s20]
            %48 = vst [vmem:[%s28 + $0x90] sm:%s20] %v47
            %v49 = vld [vmem:[%s27 + $0x50] sm:%s20]
            %50 = vst [vmem:[%s28 + $0xa0] sm:%s20] %v49
            %v51 = vld [vmem:[%s27 + $0x58] sm:%s20]
            %52 = vst [vmem:[%s28 + $0xb0] sm:%s20] %v51
            %v53 = vld [vmem:[%s27 + $0x60] sm:%s20]
            %54 = vst [vmem:[%s28 + $0xc0] sm:%s20] %v53
            %v55 = vld [vmem:[%s27 + $0x68] sm:%s20]
            %56 = vst [vmem:[%s28 + $0xd0] sm:%s20] %v55
            %v57 = vld [vmem:[%s27 + $0x70] sm:%s20]
            %58 = vst [vmem:[%s28 + $0xe0] sm:%s20] %v57
            %v59 = vld [vmem:[%s27 + $0x78] sm:%s20]
            %60 = vst [vmem:[%s28 + $0xf0] sm:%s20] %v59
          $region26: #{conv1d_forward.1} parent=20 // loop_footer
            %s26 = sadd.s32 1, %s22
          $region27: #{conv1d_forward.1} parent=20 // loop_footer_branch
            %21 = sbr.rel target = $region23
          $region28: #{conv1d_forward.1} parent=20 // loop_exit
            _
        $region21: #{conv1d_forward.1} parent=12 // pred_fallthru
          _
      $region13: #{conv1d_forward.1} parent=8 // pred_fallthru
        _
      %105 = vnop
    $region9: #{conv1d_forward.1} parent=1 // pred_fallthru
      _
    // Predicated region
    $region44: #{conv1d_forward.1} parent=1 // pred_check
      _
    $region45: #{conv1d_forward.1} parent=1 // pred_check_branch
      %107 = sbr.rel (0) target = $region47
    $region46: #{conv1d_forward.1} parent=1 // pred_region
      _
    $region47: #{conv1d_forward.1} parent=1 // pred_fallthru
      _
    // Predicated region
    $region48: #{conv1d_forward.1} parent=1 // pred_check
      _
    $region49: #{conv1d_forward.1} parent=1 // pred_check_branch
      %109 = sbr.rel (0) target = $region51
    $region50: #{conv1d_forward.1} parent=1 // pred_region
      _
    $region51: #{conv1d_forward.1} parent=1 // pred_fallthru
      _
    %p110 = scmp.eq.s32.totalorder 0, 0
    // Predicated region
    $region52: #{conv1d_forward.1} parent=1 // pred_check
      %p111 = pneg %p110
    $region53: #{conv1d_forward.1} parent=1 // pred_check_branch
      %113 = sbr.rel (%p111) target = $region55
    $region54: #{conv1d_forward.1} parent=1 // pred_region
      %v114 = vld [vmem:[%s2] sm:$0x3]
      %v116 = vlaneseq
      %v117 = vshrl.u32 %v116, 7
      %v118 = vsub.s32 0, %v117
      %v119 = vrot.slane %v114, %v118
      %v120 = vlaneseq
      %v121 = vshrl.u32 %v120, 7
      %v122 = vsub.s32 1, %v121
      %v123 = vrot.slane %v114, %v122
      %126 = vst [vmem:[#allocation2] sm:$0xff] %v119
      %127 = vst [vmem:[#allocation2 + $0x8] sm:$0xff] %v123
      %128 = vst [vmem:[#allocation2 + $0x10] sm:$0xff] %v119
      %129 = vst [vmem:[#allocation2 + $0x18] sm:$0xff] %v123
    $region55: #{conv1d_forward.1} parent=1 // pred_fallthru
      _
    %v130 = vld [vmem:[#allocation2] sm:$0xff]
    %v131 = vld [vmem:[#allocation2 + $0x8] sm:$0xff]
    %v132 = vld [vmem:[#allocation2 + $0x10] sm:$0xff]
    %v133 = vld [vmem:[#allocation2 + $0x18] sm:$0xff]
    %v134 = vld [vmem:[%s0] sm:$0xff]
    %v135 = vld [vmem:[%s0 + $0x8] sm:$0xff]
    %v136 = vld [vmem:[#allocation3] sm:$0xff]
    %v137 = vld [vmem:[#allocation3 + $0x8] sm:$0xff]
    %v138 = vld [vmem:[#allocation3 + $0x10] sm:$0xff]
    %v139 = vld [vmem:[#allocation3 + $0x18] sm:$0xff]
    %v140 = vld [vmem:[#allocation3 + $0x20] sm:$0xff]
    %v141 = vld [vmem:[#allocation3 + $0x28] sm:$0xff]
    %v142 = vld [vmem:[#allocation3 + $0x30] sm:$0xff]
    %v143 = vld [vmem:[#allocation3 + $0x38] sm:$0xff]
    %v144 = vld [vmem:[#allocation3 + $0x40] sm:$0xff]
    %v145 = vld [vmem:[#allocation3 + $0x48] sm:$0xff]
    %v146 = vld [vmem:[#allocation3 + $0x50] sm:$0xff]
    %v147 = vld [vmem:[#allocation3 + $0x58] sm:$0xff]
    %v148 = vld [vmem:[#allocation3 + $0x60] sm:$0xff]
    %v149 = vld [vmem:[#allocation3 + $0x68] sm:$0xff]
    %v150 = vld [vmem:[#allocation3 + $0x70] sm:$0xff]
    %v151 = vld [vmem:[#allocation3 + $0x78] sm:$0xff]
    %v152 = vld [vmem:[#allocation3 + $0x80] sm:$0xff]
    %v153 = vld [vmem:[#allocation3 + $0x88] sm:$0xff]
    %v154 = vld [vmem:[#allocation3 + $0x90] sm:$0xff]
    %v155 = vld [vmem:[#allocation3 + $0x98] sm:$0xff]
    %v156 = vld [vmem:[#allocation3 + $0xa0] sm:$0xff]
    %v157 = vld [vmem:[#allocation3 + $0xa8] sm:$0xff]
    %v158 = vld [vmem:[#allocation3 + $0xb0] sm:$0xff]
    %v159 = vld [vmem:[#allocation3 + $0xb8] sm:$0xff]
    %v160 = vld [vmem:[#allocation3 + $0xc0] sm:$0xff]
    %v161 = vld [vmem:[#allocation3 + $0xc8] sm:$0xff]
    %v162 = vld [vmem:[#allocation3 + $0xd0] sm:$0xff]
    %v163 = vld [vmem:[#allocation3 + $0xd8] sm:$0xff]
    %v164 = vld [vmem:[#allocation3 + $0xe0] sm:$0xff]
    %v165 = vld [vmem:[#allocation3 + $0xe8] sm:$0xff]
    %v166 = vld [vmem:[#allocation3 + $0xf0] sm:$0xff]
    %v167 = vld [vmem:[#allocation3 + $0xf8] sm:$0xff]
    %168 = vmatprep.subr.mxu0 %v167
    %169 = vmatpush1.msra.mxu0 %v166
    %170 = vmatprep.subr.mxu0 %v165
    %171 = vmatpush1.msra.mxu0 %v164
    %172 = vmatprep.subr.mxu0 %v163
    %173 = vmatpush1.msra.mxu0 %v162
    %174 = vmatprep.subr.mxu0 %v161
    %175 = vmatpush1.msra.mxu0 %v160
    %176 = vmatprep.subr.mxu0 %v159
    %177 = vmatpush1.msra.mxu0 %v158
    %178 = vmatprep.subr.mxu0 %v157
    %179 = vmatpush1.msra.mxu0 %v156
    %180 = vmatprep.subr.mxu0 %v155
    %181 = vmatpush1.msra.mxu0 %v154
    %182 = vmatprep.subr.mxu0 %v153
    %183 = vmatpush1.msra.mxu0 %v152
    %184 = vmatprep.subr.mxu0 %v151
    %185 = vmatpush1.msra.mxu0 %v150
    %186 = vmatprep.subr.mxu0 %v149
    %187 = vmatpush1.msra.mxu0 %v148
    %188 = vmatprep.subr.mxu0 %v147
    %189 = vmatpush1.msra.mxu0 %v146
    %190 = vmatprep.subr.mxu0 %v145
    %191 = vmatpush1.msra.mxu0 %v144
    %192 = vmatprep.subr.mxu0 %v143
    %193 = vmatpush1.msra.mxu0 %v142
    %194 = vmatprep.subr.mxu0 %v141
    %195 = vmatpush1.msra.mxu0 %v140
    %196 = vmatprep.subr.mxu0 %v139
    %197 = vmatpush1.msra.mxu0 %v138
    %198 = vmatprep.subr.mxu0 %v137
    %199 = vmatpush1.msra.mxu0 %v136
    %200 = vmatprep.subr.mxu0 0.0
    %201 = vmatpush2.msra.mxu0 0.0
    %202 = vmatprep.subr.mxu0 0.0
    %203 = vmatpush2.msra.mxu0 0.0
    %204 = vmatprep.subr.mxu0 0.0
    %205 = vmatpush2.msra.mxu0 0.0
    %206 = vmatprep.subr.mxu0 0.0
    %207 = vmatpush2.msra.mxu0 0.0
    %208 = vmatprep.subr.mxu0 0.0
    %209 = vmatpush2.msra.mxu0 0.0
    %210 = vmatprep.subr.mxu0 0.0
    %211 = vmatpush2.msra.mxu0 0.0
    %212 = vmatprep.subr.mxu0 0.0
    %213 = vmatpush2.msra.mxu0 0.0
    %214 = vmatprep.subr.mxu0 0.0
    %215 = vmatpush2.msra.mxu0 0.0
    %216 = vmatprep.subr.mxu0 0.0
    %217 = vmatpush2.msra.mxu0 0.0
    %218 = vmatprep.subr.mxu0 0.0
    %219 = vmatpush2.msra.mxu0 0.0
    %220 = vmatprep.subr.mxu0 0.0
    %221 = vmatpush2.msra.mxu0 0.0
    %222 = vmatprep.subr.mxu0 0.0
    %223 = vmatpush2.msra.mxu0 0.0
    %224 = vmatprep.subr.mxu0 0.0
    %225 = vmatpush2.msra.mxu0 0.0
    %226 = vmatprep.subr.mxu0 0.0
    %227 = vmatpush2.msra.mxu0 0.0
    %228 = vmatprep.subr.mxu0 0.0
    %229 = vmatpush2.msra.mxu0 0.0
    %230 = vmatprep.subr.mxu0 0.0
    %231 = vmatpush2.msra.mxu0 0.0
    %232 = vmatprep.mubr.f32.mxu0 0.0
    %233 = vmatmul.mubr.f32.gmra.mxu0 %v134
    %v234 = vpop.f32.mrf.mxu0
    %v235 = vadd.f32 0.0, %v234
    %v236 = vpop.f32.mrf.mxu0
    %v237 = vadd.f32 0.0, %v236
    %238 = vmatprep.mubr.f32.mxu0 0.0
    %239 = vmatmul.mubr.f32.gmra.mxu0 %v135
    %v240 = vpop.f32.mrf.mxu0
    %v241 = vadd.f32 0.0, %v240
    %v242 = vpop.f32.mrf.mxu0
    %v243 = vadd.f32 0.0, %v242
    %244 = vdwg.mxu0
    %v245 = vadd.f32 %v130, %v235
    %v246 = vadd.f32 %v131, %v237
    %v247 = vadd.f32 %v132, %v241
    %v248 = vadd.f32 %v133, %v243
    %249 = vst [vmem:[#allocation2] sm:$0xff] %v245
    %250 = vst [vmem:[#allocation2 + $0x8] sm:$0xff] %v246
    %251 = vst [vmem:[#allocation2 + $0x10] sm:$0xff] %v247
    %252 = vst [vmem:[#allocation2 + $0x18] sm:$0xff] %v248
    // Predicated region
    $region56: #{conv1d_forward.1} parent=1 // pred_check
      %p253 = pneg %p110
    $region57: #{conv1d_forward.1} parent=1 // pred_check_branch
      %255 = sbr.rel (%p253) target = $region59
    $region58: #{conv1d_forward.1} parent=1 // pred_region
      %v256 = vld [vmem:[#allocation2] sm:$0xff]
      %v257 = vld [vmem:[#allocation2 + $0x8] sm:$0xff]
      %v258 = vld [vmem:[#allocation2 + $0x10] sm:$0xff]
      %v259 = vld [vmem:[#allocation2 + $0x18] sm:$0xff]
      %260 = vst [vmem:[#allocation4] sm:$0xff] %v256
      %261 = vst [vmem:[#allocation4 + $0x8] sm:$0xff] %v257
      %262 = vst [vmem:[#allocation4 + $0x10] sm:$0xff] %v258
      %263 = vst [vmem:[#allocation4 + $0x18] sm:$0xff] %v259
    $region59: #{conv1d_forward.1} parent=1 // pred_fallthru
      _
    // Predicated region
    $region60: #{conv1d_forward.1} parent=1 // pred_check
      _
    $region61: #{conv1d_forward.1} parent=1 // pred_check_branch
      %265 = sbr.rel (0) target = $region63
    $region62: #{conv1d_forward.1} parent=1 // pred_region
      %s267 = ssub.s32 512, 256
      %268 = vsyncadd [#allocation5], %s267
      %s269 = sshll.u32 [#allocation4], 4
      %s270 = int_to_ptr.vmem [resolvable:$true] %s269
      %275 = dma.vmem_to_hbm [thread:$0]  %s270, 256, %s3, [#allocation5], 256, 128, 8
    $region63: #{conv1d_forward.1} parent=1 // pred_fallthru
      _
    // Predicated region
    $region64: #{conv1d_forward.1} parent=1 // pred_check
      _
    $region65: #{conv1d_forward.1} parent=1 // pred_check_branch
      %277 = sbr.rel (0) target = $region67
    $region66: #{conv1d_forward.1} parent=1 // pred_region
      %278 = dma.done [#allocation5], 512
    $region67: #{conv1d_forward.1} parent=1 // pred_fallthru
      _
    %279 = vsyncpa [#allocation5], 1

</llo_original>
